<compile_context>
chip_gen: v5e
topology: v5e:2x2
jax: 0.10.0
libtpu: 0.0.40
codegen_flags: <defaults>
</compile_context>

<pallas_src>
import jax
import jax.numpy as jnp
from jax import lax
from jax.experimental import pallas as pl
from jax.experimental.pallas import tpu as pltpu


def _round_up(x, m):
    return (x + m - 1) // m * m


def _grad_partial_kernel(y_ref, out_ref, sp_ref):
    # y_ref : (Bt, C, H, W)  block of Bt batch elements
    # out_ref: (1, 1, Wp)    lane-wise partial sums (cols >= W are junk and are
    #                        sliced off by the wrapper before the final sum)
    # sp_ref : (Hp, Wp) f32  scratch; the channel-sum plane lives at rows
    #                        [8, 8+H), cols [0, W); rows 7 and 8+H are the
    #                        conv zero padding.
    Bt, C, H, W = y_ref.shape
    _Hp, Wp = sp_ref.shape

    # Zero ONLY the two padding rows the vertical stencil reads (not the whole
    # scratch; not a program_id==0 init -- each core has its own scratch).
    zrow = jnp.zeros((1, Wp), jnp.float32)
    sp_ref[pl.ds(7, 1), :] = zrow
    sp_ref[pl.ds(8 + H, 1), :] = zrow

    # Lane-boundary masks for the horizontal +/-1 taps (hoisted out of the
    # image loop).  Rolls wrap around; whatever wraps into col 0 / col W-1 is
    # zeroed here, so the scratch pad columns never need zero-filling.
    col = lax.broadcasted_iota(jnp.int32, (H, Wp), 1)
    not_first_col = col > 0
    not_last_col = col < (W - 1)

    def shift_right(a):  # a[:, j-1], zero at j == 0        (lane roll -> XLU)
        return jnp.where(not_first_col, pltpu.roll(a, shift=1, axis=1), 0.0)

    def shift_left(a):   # a[:, j+1], zero at j == W-1      (lane roll -> XLU)
        return jnp.where(not_last_col, pltpu.roll(a, shift=Wp - 1, axis=1), 0.0)

    acc = jnp.zeros((1, Wp), jnp.float32)
    for bt in range(Bt):                               # static, Bt <= 8
        # Channel sum accumulated plane-by-plane in f32 (no materialized full
        # f32 copy of the (C, H, W) block; bf16 inputs are fine).
        s = y_ref[bt, 0].astype(jnp.float32)
        for c in range(1, C):
            s = s + y_ref[bt, c].astype(jnp.float32)

        # Sublane- and lane-aligned store of the plane (row 8, col 0).
        sp_ref[pl.ds(8, H), pl.ds(0, W)] = s

        # Vertical pass: three row-shifted full-width window loads.  Only the
        # +/-1 taps are sublane-misaligned; the store and center tap are not.
        r_up = sp_ref[pl.ds(7, H), :]                  # row i-1 (zero at i==0)
        r_c = sp_ref[pl.ds(8, H), :]                   # row i
        r_dn = sp_ref[pl.ds(9, H), :]                  # row i+1 (zero at i==H-1)
        sv = r_up + 2.0 * r_c + r_dn                   # [1, 2, 1]  vertical
        dv = r_dn - r_up                               # [-1, 0, 1] vertical

        # Horizontal pass on the otherwise-idle XLU.
        gx = shift_left(sv) - shift_right(sv)              # [-1, 0, 1] horiz.
        gy = shift_right(dv) + 2.0 * dv + shift_left(dv)   # [1, 2, 1]  horiz.

        acc = acc + jnp.sum(jnp.abs(gx) + jnp.abs(gy), axis=0, keepdims=True)

    out_ref[...] = acc.reshape(1, 1, Wp)


def grad_loss(y_pred, penalty=1, loss_mult=None):
    """Pallas implementation of the Grad module's forward pass (scalar loss)."""
    # TODO(synk): only penalty=1 (module default, L1 over the gradient axis) is
    # implemented; penalty=2 would need sqrt(gx**2 + gy**2) instead of |gx|+|gy|.
    assert penalty == 1, "only penalty=1 (module default) is implemented"
    B, C, H, W = y_pred.shape
    itemsize = jnp.dtype(y_pred.dtype).itemsize

    # Block several images per grid step when images are small (amortizes the
    # ~0.35 us per-step pipeline overhead).  Bt divides B; capped so the
    # unrolled in-kernel image loop stays small.
    img_bytes = C * H * W * itemsize
    Bt = 1
    for cand in range(1, min(B, 8) + 1):
        if B % cand == 0 and cand * img_bytes <= (1 << 20):
            Bt = cand
    nb = B // Bt

    Hp = _round_up(H + 9, 8)          # data rows [8, 8+H), zero rows 7 / 8+H
    Wp = _round_up(W, 128)            # lane-dense working / output width

    # Per-generation VMEM budget: ~3/4 of physical VMEM (~48 MiB on v7x,
    # ~96 MiB on v5e/v6e), but never more than this kernel can actually use.
    plane = H * Wp * 4
    need = 2 * Bt * img_bytes + Hp * Wp * 4 + 10 * plane + (2 << 20)
    try:
        vmem_cap = int(pltpu.get_tpu_info().vmem_capacity_bytes)
    except Exception:
        vmem_cap = 64 * 1024 * 1024
    vmem_limit = int(min(max(need, 16 << 20), (3 * vmem_cap) // 4))

    cost = pl.CostEstimate(
        flops=B * H * W * (C + 12),
        transcendentals=0,
        bytes_accessed=B * C * H * W * itemsize + nb * Wp * 4,
    )

    partials = pl.pallas_call(
        _grad_partial_kernel,
        out_shape=jax.ShapeDtypeStruct((nb, 1, Wp), jnp.float32),
        grid_spec=pltpu.PrefetchScalarGridSpec(
            num_scalar_prefetch=0,
            grid=(nb,),
            in_specs=[pl.BlockSpec((Bt, C, H, W), lambda b: (b, 0, 0, 0))],
            out_specs=pl.BlockSpec((1, 1, Wp), lambda b: (b, 0, 0)),
            scratch_shapes=[pltpu.VMEM((Hp, Wp), jnp.float32)],
        ),
        compiler_params=pltpu.CompilerParams(
            dimension_semantics=("parallel",),
            vmem_limit_bytes=vmem_limit,
        ),
        cost_estimate=cost,
    )(y_pred)

    # Single cross-lane reduction + mean / loss_mult scaling, once, in the
    # wrapper; columns >= W of each lane partial are junk and sliced off first.
    total = jnp.sum(partials[:, :, :W])
    inv_count = 1.0 / float(B * 1 * H * W)           # mean over (B, 1, H, W)
    mult = 1.0 if loss_mult is None else float(loss_mult)
    return total * (inv_count * mult)


def grad_loss_ref(y_pred, loss_mult=None):
    """Pure-JAX reference mirroring the PyTorch module (for verification)."""
    B, C, H, W = y_pred.shape
    kx = jnp.array([[-1., 0., 1.], [-2., 0., 2.], [-1., 0., 1.]], jnp.float32)
    ky = jnp.array([[-1., -2., -1.], [0., 0., 0.], [1., 2., 1.]], jnp.float32)
    wx = jnp.broadcast_to(kx, (1, C, 3, 3))
    wy = jnp.broadcast_to(ky, (1, C, 3, 3))
    dn = ('NCHW', 'OIHW', 'NCHW')
    y = y_pred.astype(jnp.float32)
    gx = lax.conv_general_dilated(y, wx, (1, 1), ((1, 1), (1, 1)),
                                  dimension_numbers=dn)
    gy = lax.conv_general_dilated(y, wy, (1, 1), ((1, 1), (1, 1)),
                                  dimension_numbers=dn)
    loss = jnp.mean(jnp.abs(gx) + jnp.abs(gy))
    if loss_mult is not None:
        loss = loss * loss_mult
    return loss


if __name__ == "__main__":
    key = jax.random.PRNGKey(0)
    B, C, H, W = 2, 4, 16, 16
    y_pred = jax.random.normal(key, (B, C, H, W), dtype=jnp.float32)

    out = jax.block_until_ready(grad_loss(y_pred))
    ref = grad_loss_ref(y_pred)
    assert jnp.allclose(out, ref, rtol=1e-5, atol=1e-5), (out, ref)

    print("KERNEL_OK")
</pallas_src>

<mosaic_0001>
module attributes {stable_mosaic.version = 11 : i64} {
  func.func @_grad_partial_kernel(%arg0: i32, %arg1: memref<2x4x16x16xf32, #tpu.memory_space<vmem>>, %arg2: memref<1x1x128xf32, #tpu.memory_space<vmem>>, %arg3: memref<32x128xf32, #tpu.memory_space<vmem>>) attributes {dimension_semantics = [#tpu.dimension_semantics<parallel>], iteration_bounds = array<i64: 1>, scalar_prefetch = 0 : i64, scratch_operands = 1 : i64, tpu.core_type = #tpu.core_type<tc>, window_params = [{transform_indices = @transform_0, window_bounds = array<i64: 2, 4, 16, 16>}, {transform_indices = @transform_1, window_bounds = array<i64: 1, 1, 128>}]} {
    %cst = arith.constant 0.000000e+00 : f32
    %0 = vector.broadcast %cst : f32 to vector<1x128xf32>
    %c7 = arith.constant 7 : index
    %c0 = arith.constant 0 : index
    %1 = vector.load %arg3[%c7, %c0] : memref<32x128xf32, #tpu.memory_space<vmem>>, vector<1x128xf32>
    tpu.vector_store %arg3[%c7, %c0], %0 {strides = array<i32>} : memref<32x128xf32, #tpu.memory_space<vmem>>, vector<1x128xf32>,
    %c24 = arith.constant 24 : index
    %c0_0 = arith.constant 0 : index
    %2 = vector.load %arg3[%c24, %c0_0] : memref<32x128xf32, #tpu.memory_space<vmem>>, vector<1x128xf32>
    tpu.vector_store %arg3[%c24, %c0_0], %0 {strides = array<i32>} : memref<32x128xf32, #tpu.memory_space<vmem>>, vector<1x128xf32>,
    %3 = tpu.iota {dimensions = array<i32: 1>} : vector<16x128xi32>
    %c0_i32 = arith.constant 0 : i32
    %4 = vector.broadcast %c0_i32 : i32 to vector<16x128xi32>
    %5 = arith.cmpi sgt, %3, %4 : vector<16x128xi32>
    %c15_i32 = arith.constant 15 : i32
    %6 = vector.broadcast %c15_i32 : i32 to vector<16x128xi32>
    %7 = arith.cmpi slt, %3, %6 : vector<16x128xi32>
    %cst_1 = arith.constant 0.000000e+00 : f32
    %8 = vector.broadcast %cst_1 : f32 to vector<1x128xf32>
    %c0_2 = arith.constant 0 : index
    %c0_3 = arith.constant 0 : index
    %c0_4 = arith.constant 0 : index
    %c0_5 = arith.constant 0 : index
    %9 = vector.load %arg1[%c0_2, %c0_3, %c0_4, %c0_5] : memref<2x4x16x16xf32, #tpu.memory_space<vmem>>, vector<1x1x16x16xf32>
    %10 = vector.shape_cast %9 : vector<1x1x16x16xf32> to vector<16x16xf32>
    %c0_6 = arith.constant 0 : index
    %c1 = arith.constant 1 : index
    %c0_7 = arith.constant 0 : index
    %c0_8 = arith.constant 0 : index
    %11 = vector.load %arg1[%c0_6, %c1, %c0_7, %c0_8] : memref<2x4x16x16xf32, #tpu.memory_space<vmem>>, vector<1x1x16x16xf32>
    %12 = vector.shape_cast %11 : vector<1x1x16x16xf32> to vector<16x16xf32>
    %13 = arith.addf %10, %12 : vector<16x16xf32>
    %c0_9 = arith.constant 0 : index
    %c2 = arith.constant 2 : index
    %c0_10 = arith.constant 0 : index
    %c0_11 = arith.constant 0 : index
    %14 = vector.load %arg1[%c0_9, %c2, %c0_10, %c0_11] : memref<2x4x16x16xf32, #tpu.memory_space<vmem>>, vector<1x1x16x16xf32>
    %15 = vector.shape_cast %14 : vector<1x1x16x16xf32> to vector<16x16xf32>
    %16 = arith.addf %13, %15 : vector<16x16xf32>
    %c0_12 = arith.constant 0 : index
    %c3 = arith.constant 3 : index
    %c0_13 = arith.constant 0 : index
    %c0_14 = arith.constant 0 : index
    %17 = vector.load %arg1[%c0_12, %c3, %c0_13, %c0_14] : memref<2x4x16x16xf32, #tpu.memory_space<vmem>>, vector<1x1x16x16xf32>
    %18 = vector.shape_cast %17 : vector<1x1x16x16xf32> to vector<16x16xf32>
    %19 = arith.addf %16, %18 : vector<16x16xf32>
    %c8 = arith.constant 8 : index
    %c0_15 = arith.constant 0 : index
    %20 = vector.load %arg3[%c8, %c0_15] : memref<32x128xf32, #tpu.memory_space<vmem>>, vector<16x16xf32>
    tpu.vector_store %arg3[%c8, %c0_15], %19 {strides = array<i32>} : memref<32x128xf32, #tpu.memory_space<vmem>>, vector<16x16xf32>,
    %c7_16 = arith.constant 7 : index
    %c0_17 = arith.constant 0 : index
    %21 = vector.load %arg3[%c7_16, %c0_17] : memref<32x128xf32, #tpu.memory_space<vmem>>, vector<16x128xf32>
    %c8_18 = arith.constant 8 : index
    %c0_19 = arith.constant 0 : index
    %22 = vector.load %arg3[%c8_18, %c0_19] : memref<32x128xf32, #tpu.memory_space<vmem>>, vector<16x128xf32>
    %c9 = arith.constant 9 : index
    %c0_20 = arith.constant 0 : index
    %23 = vector.load %arg3[%c9, %c0_20] : memref<32x128xf32, #tpu.memory_space<vmem>>, vector<16x128xf32>
    %cst_21 = arith.constant 2.000000e+00 : f32
    %24 = vector.broadcast %cst_21 : f32 to vector<16x128xf32>
    %25 = arith.mulf %24, %22 : vector<16x128xf32>
    %26 = arith.addf %21, %25 : vector<16x128xf32>
    %27 = arith.addf %26, %23 : vector<16x128xf32>
    %28 = arith.subf %23, %21 : vector<16x128xf32>
    %c127_i32 = arith.constant 127 : i32
    %29 = tpu.dynamic_rotate %27 by %c127_i32 dim 1 : vector<16x128xf32>, i32 -> vector<16x128xf32>
    %cst_22 = arith.constant 0.000000e+00 : f32
    %30 = vector.broadcast %cst_22 : f32 to vector<16x128xf32>
    %31 = arith.select %7, %29, %30 : vector<16x128xi1>, vector<16x128xf32>
    %c1_i32 = arith.constant 1 : i32
    %32 = tpu.dynamic_rotate %27 by %c1_i32 dim 1 : vector<16x128xf32>, i32 -> vector<16x128xf32>
    %cst_23 = arith.constant 0.000000e+00 : f32
    %33 = vector.broadcast %cst_23 : f32 to vector<16x128xf32>
    %34 = arith.select %5, %32, %33 : vector<16x128xi1>, vector<16x128xf32>
    %35 = arith.subf %31, %34 : vector<16x128xf32>
    %c1_i32_24 = arith.constant 1 : i32
    %36 = tpu.dynamic_rotate %28 by %c1_i32_24 dim 1 : vector<16x128xf32>, i32 -> vector<16x128xf32>
    %cst_25 = arith.constant 0.000000e+00 : f32
    %37 = vector.broadcast %cst_25 : f32 to vector<16x128xf32>
    %38 = arith.select %5, %36, %37 : vector<16x128xi1>, vector<16x128xf32>
    %cst_26 = arith.constant 2.000000e+00 : f32
    %39 = vector.broadcast %cst_26 : f32 to vector<16x128xf32>
    %40 = arith.mulf %39, %28 : vector<16x128xf32>
    %41 = arith.addf %38, %40 : vector<16x128xf32>
    %c127_i32_27 = arith.constant 127 : i32
    %42 = tpu.dynamic_rotate %28 by %c127_i32_27 dim 1 : vector<16x128xf32>, i32 -> vector<16x128xf32>
    %cst_28 = arith.constant 0.000000e+00 : f32
    %43 = vector.broadcast %cst_28 : f32 to vector<16x128xf32>
    %44 = arith.select %7, %42, %43 : vector<16x128xi1>, vector<16x128xf32>
    %45 = arith.addf %41, %44 : vector<16x128xf32>
    %46 = math.absf %35 : vector<16x128xf32>
    %47 = math.absf %45 : vector<16x128xf32>
    %48 = arith.addf %46, %47 : vector<16x128xf32>
    %cst_29 = arith.constant dense<0.000000e+00> : vector<128xf32>
    %49 = vector.multi_reduction <add>, %48, %cst_29 [0] : vector<16x128xf32> to vector<128xf32>
    %50 = vector.shape_cast %49 : vector<128xf32> to vector<1x128xf32>
    %51 = arith.addf %8, %50 : vector<1x128xf32>
    %c1_30 = arith.constant 1 : index
    %c0_31 = arith.constant 0 : index
    %c0_32 = arith.constant 0 : index
    %c0_33 = arith.constant 0 : index
    %52 = vector.load %arg1[%c1_30, %c0_31, %c0_32, %c0_33] : memref<2x4x16x16xf32, #tpu.memory_space<vmem>>, vector<1x1x16x16xf32>
    %53 = vector.shape_cast %52 : vector<1x1x16x16xf32> to vector<16x16xf32>
    %c1_34 = arith.constant 1 : index
    %c1_35 = arith.constant 1 : index
    %c0_36 = arith.constant 0 : index
    %c0_37 = arith.constant 0 : index
    %54 = vector.load %arg1[%c1_34, %c1_35, %c0_36, %c0_37] : memref<2x4x16x16xf32, #tpu.memory_space<vmem>>, vector<1x1x16x16xf32>
    %55 = vector.shape_cast %54 : vector<1x1x16x16xf32> to vector<16x16xf32>
    %56 = arith.addf %53, %55 : vector<16x16xf32>
    %c1_38 = arith.constant 1 : index
    %c2_39 = arith.constant 2 : index
    %c0_40 = arith.constant 0 : index
    %c0_41 = arith.constant 0 : index
    %57 = vector.load %arg1[%c1_38, %c2_39, %c0_40, %c0_41] : memref<2x4x16x16xf32, #tpu.memory_space<vmem>>, vector<1x1x16x16xf32>
    %58 = vector.shape_cast %57 : vector<1x1x16x16xf32> to vector<16x16xf32>
    %59 = arith.addf %56, %58 : vector<16x16xf32>
    %c1_42 = arith.constant 1 : index
    %c3_43 = arith.constant 3 : index
    %c0_44 = arith.constant 0 : index
    %c0_45 = arith.constant 0 : index
    %60 = vector.load %arg1[%c1_42, %c3_43, %c0_44, %c0_45] : memref<2x4x16x16xf32, #tpu.memory_space<vmem>>, vector<1x1x16x16xf32>
    %61 = vector.shape_cast %60 : vector<1x1x16x16xf32> to vector<16x16xf32>
    %62 = arith.addf %59, %61 : vector<16x16xf32>
    %c8_46 = arith.constant 8 : index
    %c0_47 = arith.constant 0 : index
    %63 = vector.load %arg3[%c8_46, %c0_47] : memref<32x128xf32, #tpu.memory_space<vmem>>, vector<16x16xf32>
    tpu.vector_store %arg3[%c8_46, %c0_47], %62 {strides = array<i32>} : memref<32x128xf32, #tpu.memory_space<vmem>>, vector<16x16xf32>,
    %c7_48 = arith.constant 7 : index
    %c0_49 = arith.constant 0 : index
    %64 = vector.load %arg3[%c7_48, %c0_49] : memref<32x128xf32, #tpu.memory_space<vmem>>, vector<16x128xf32>
    %c8_50 = arith.constant 8 : index
    %c0_51 = arith.constant 0 : index
    %65 = vector.load %arg3[%c8_50, %c0_51] : memref<32x128xf32, #tpu.memory_space<vmem>>, vector<16x128xf32>
    %c9_52 = arith.constant 9 : index
    %c0_53 = arith.constant 0 : index
    %66 = vector.load %arg3[%c9_52, %c0_53] : memref<32x128xf32, #tpu.memory_space<vmem>>, vector<16x128xf32>
    %cst_54 = arith.constant 2.000000e+00 : f32
    %67 = vector.broadcast %cst_54 : f32 to vector<16x128xf32>
    %68 = arith.mulf %67, %65 : vector<16x128xf32>
    %69 = arith.addf %64, %68 : vector<16x128xf32>
    %70 = arith.addf %69, %66 : vector<16x128xf32>
    %71 = arith.subf %66, %64 : vector<16x128xf32>
    %c127_i32_55 = arith.constant 127 : i32
    %72 = tpu.dynamic_rotate %70 by %c127_i32_55 dim 1 : vector<16x128xf32>, i32 -> vector<16x128xf32>
    %cst_56 = arith.constant 0.000000e+00 : f32
    %73 = vector.broadcast %cst_56 : f32 to vector<16x128xf32>
    %74 = arith.select %7, %72, %73 : vector<16x128xi1>, vector<16x128xf32>
    %c1_i32_57 = arith.constant 1 : i32
    %75 = tpu.dynamic_rotate %70 by %c1_i32_57 dim 1 : vector<16x128xf32>, i32 -> vector<16x128xf32>
    %cst_58 = arith.constant 0.000000e+00 : f32
    %76 = vector.broadcast %cst_58 : f32 to vector<16x128xf32>
    %77 = arith.select %5, %75, %76 : vector<16x128xi1>, vector<16x128xf32>
    %78 = arith.subf %74, %77 : vector<16x128xf32>
    %c1_i32_59 = arith.constant 1 : i32
    %79 = tpu.dynamic_rotate %71 by %c1_i32_59 dim 1 : vector<16x128xf32>, i32 -> vector<16x128xf32>
    %cst_60 = arith.constant 0.000000e+00 : f32
    %80 = vector.broadcast %cst_60 : f32 to vector<16x128xf32>
    %81 = arith.select %5, %79, %80 : vector<16x128xi1>, vector<16x128xf32>
    %cst_61 = arith.constant 2.000000e+00 : f32
    %82 = vector.broadcast %cst_61 : f32 to vector<16x128xf32>
    %83 = arith.mulf %82, %71 : vector<16x128xf32>
    %84 = arith.addf %81, %83 : vector<16x128xf32>
    %c127_i32_62 = arith.constant 127 : i32
    %85 = tpu.dynamic_rotate %71 by %c127_i32_62 dim 1 : vector<16x128xf32>, i32 -> vector<16x128xf32>
    %cst_63 = arith.constant 0.000000e+00 : f32
    %86 = vector.broadcast %cst_63 : f32 to vector<16x128xf32>
    %87 = arith.select %7, %85, %86 : vector<16x128xi1>, vector<16x128xf32>
    %88 = arith.addf %84, %87 : vector<16x128xf32>
    %89 = math.absf %78 : vector<16x128xf32>
    %90 = math.absf %88 : vector<16x128xf32>
    %91 = arith.addf %89, %90 : vector<16x128xf32>
    %cst_64 = arith.constant dense<0.000000e+00> : vector<128xf32>
    %92 = vector.multi_reduction <add>, %91, %cst_64 [0] : vector<16x128xf32> to vector<128xf32>
    %93 = vector.shape_cast %92 : vector<128xf32> to vector<1x128xf32>
    %94 = arith.addf %51, %93 : vector<1x128xf32>
    %95 = vector.shape_cast %94 : vector<1x128xf32> to vector<1x1x128xf32>
    %c0_65 = arith.constant 0 : index
    %c0_66 = arith.constant 0 : index
    %c0_67 = arith.constant 0 : index
    %96 = vector.load %arg2[%c0_65, %c0_66, %c0_67] : memref<1x1x128xf32, #tpu.memory_space<vmem>>, vector<1x1x128xf32>
    tpu.vector_store %arg2[%c0_65, %c0_66, %c0_67], %95 {strides = array<i32>} : memref<1x1x128xf32, #tpu.memory_space<vmem>>, vector<1x1x128xf32>,
    return
  }
  func.func @transform_0(%arg0: i32) -> (i32, i32, i32, i32) {
    %c0_i32 = arith.constant 0 : i32
    %c0_i32_0 = arith.constant 0 : i32
    %c0_i32_1 = arith.constant 0 : i32
    %c0_i32_2 = arith.constant 0 : i32
    return %arg0, %c0_i32, %c0_i32_0, %c0_i32_1 : i32, i32, i32, i32
  }
  func.func @transform_1(%arg0: i32) -> (i32, i32, i32) {
    %c0_i32 = arith.constant 0 : i32
    %c0_i32_0 = arith.constant 0 : i32
    %c0_i32_1 = arith.constant 0 : i32
    return %arg0, %c0_i32, %c0_i32_0 : i32, i32, i32
  }
}

</mosaic_0001>

<llo_original>
// kernel: tpu_custom_call.1
$region0: #{tpu_custom_call.1}
  #allocation0 [shape = 'u32[]', space=smem, size = 0x4, offset = 0x4, fixed_abs, tag = 'smem constant byte address 0x4 - core index']
  #allocation1 [shape = 'u32[72,128]{1,0:T(1,128)}', space=vmem, size = 0x9000, scoped, tag = 'internal scratch']
  #allocation2 [shape = 'f32[32,128]{1,0:T(8,128)}', space=vmem, size = 0x4000, scoped, tag = 'scratch operand']
  %s0 = inlined_call_operand.hbm [shape: f32[2,4,16,16], index: 0, kind: input, shape index: {}]
  %s1 = inlined_call_operand.hbm [shape: f32[1,1,128], index: 1, kind: output, shape index: {}]
  %s2 = sld [smem:[#allocation0]]
  $region18: #{tpu_custom_call.1} parent=0
    _
  %s4 = ssub.s32 1, %s2
  %s5 = scalar_select 0, %s4, %s2
  $region1: #{tpu_custom_call.1} parent=0
    #allocation3 [shape = 'u8[65536]{0}', space=vmem, size = 0x10000, scoped, tag = 'input window, operand 0, single buffered']
    #allocation4 [shape = 's32[1]{0}', space=sflag, size = 0x4, scoped, tag = 'scoped memory for tpu_custom_call.1']
    #allocation5 [shape = 's32[1]{0}', space=sflag, size = 0x4, scoped, tag = 'scoped memory for tpu_custom_call.1']
    #allocation6 [shape = 'u8[512]{0}', space=vmem, size = 0x400, scoped, tag = 'output window, operand 0, single buffered']
    %6 = vsyncpa [#allocation4], 0
    %7 = vsyncpa [#allocation5], 0
    // Predicated region
    $region2: #{tpu_custom_call.1} parent=1 // pred_check
      _
    $region3: #{tpu_custom_call.1} parent=1 // pred_check_branch
      %9 = sbr.rel (0) target = $region5
    $region4: #{tpu_custom_call.1} parent=1 // pred_region
      %11 = vsyncadd [#allocation4], 0
      %s12 = sshll.u32 %s0, 4
      %s13 = int_to_ptr.hbm [resolvable:$true] %s12
      %s14 = sshll.u32 [#allocation3], 4
      %s15 = int_to_ptr.vmem [resolvable:$true] %s14
      %20 = dma.hbm_to_vmem [thread:$0]  %s13, 2048, %s15, [#allocation4], 128, 128, 8
    $region5: #{tpu_custom_call.1} parent=1 // pred_fallthru
      _
    // Predicated region
    $region6: #{tpu_custom_call.1} parent=1 // pred_check
      _
    $region7: #{tpu_custom_call.1} parent=1 // pred_check_branch
      %22 = sbr.rel (0) target = $region9
    $region8: #{tpu_custom_call.1} parent=1 // pred_region
      %24 = dma.done [#allocation4], 2048
    $region9: #{tpu_custom_call.1} parent=1 // pred_fallthru
      _
    %25 = vst [vmem:[#allocation2 + $0x7] sm:$0x1] 0.0
    %26 = vst [vmem:[#allocation2 + $0x18] sm:$0x1] 0.0
    %v27 = vlaneseq
    %v28 = vand.u32 %v27, 127
    %vm29 = vcmp.gt.s32.totalorder %v28, 0
    %vm30 = vcmp.lt.s32.totalorder %v28, 15
    %v31 = vld [vmem:[#allocation3] sm:$0xff]
    %v32 = vld [vmem:[#allocation3 + $0x8] sm:$0xff]
    %s33 = scalar_lea.vmem [#allocation3], 16
    %v34 = vld [vmem:[%s33] sm:$0xff]
    %v35 = vld [vmem:[%s33 + $0x8] sm:$0xff]
    %v36 = vadd.f32 %v31, %v34
    %v37 = vadd.f32 %v32, %v35
    %s38 = scalar_lea.vmem [#allocation3], 32
    %v39 = vld [vmem:[%s38] sm:$0xff]
    %v40 = vld [vmem:[%s38 + $0x8] sm:$0xff]
    %v41 = vadd.f32 %v36, %v39
    %v42 = vadd.f32 %v37, %v40
    %s43 = scalar_lea.vmem [#allocation3], 48
    %v44 = vld [vmem:[%s43] sm:$0xff]
    %v45 = vld [vmem:[%s43 + $0x8] sm:$0xff]
    %v46 = vadd.f32 %v41, %v44
    %v47 = vadd.f32 %v42, %v45
    %vm48 = vcmask 130048
    %49 = vst.msk [vmem:[#allocation2 + $0x8] sm:$0xff] %vm48, %v46
    %50 = vst.msk [vmem:[#allocation2 + $0x10] sm:$0xff] %vm48, %v47
    %v51 = vld [vmem:[#allocation2 + $0x7] sm:$0xff]
    %v52 = vld [vmem:[#allocation2 + $0xf] sm:$0xff]
    %v53 = vld [vmem:[#allocation2 + $0x8] sm:$0xff]
    %v54 = vld [vmem:[#allocation2 + $0x10] sm:$0xff]
    %v55 = vld [vmem:[#allocation2 + $0x9] sm:$0xff]
    %v56 = vld [vmem:[#allocation2 + $0x11] sm:$0xff]
    %v57 = vmul.f32 %v53, 2.0
    %v58 = vmul.f32 %v54, 2.0
    %v59 = vadd.f32 %v51, %v57
    %v60 = vadd.f32 %v52, %v58
    %v61 = vadd.f32 %v59, %v55
    %v62 = vadd.f32 %v60, %v56
    %v63 = vsub.f32 %v55, %v51
    %v64 = vsub.f32 %v56, %v52
    %65 = vrot.lane.b32.xlu0 %v61, 127
    %v66 = vpop.permute.xlu0 %65
    %67 = vrot.lane.b32.xlu0 %v62, 127
    %v68 = vpop.permute.xlu0 %67
    %v69 = vsel %vm30, %v66, 0.0
    %v70 = vsel %vm30, %v68, 0.0
    %71 = vrot.lane.b32.xlu0 %v61, 1
    %v72 = vpop.permute.xlu0 %71
    %73 = vrot.lane.b32.xlu0 %v62, 1
    %v74 = vpop.permute.xlu0 %73
    %v75 = vsel %vm29, %v72, 0.0
    %v76 = vsel %vm29, %v74, 0.0
    %v77 = vsub.f32 %v69, %v75
    %v78 = vsub.f32 %v70, %v76
    %79 = vrot.lane.b32.xlu0 %v63, 1
    %v80 = vpop.permute.xlu0 %79
    %81 = vrot.lane.b32.xlu0 %v64, 1
    %v82 = vpop.permute.xlu0 %81
    %v83 = vsel %vm29, %v80, 0.0
    %v84 = vsel %vm29, %v82, 0.0
    %v85 = vmul.f32 %v63, 2.0
    %v86 = vmul.f32 %v64, 2.0
    %v87 = vadd.f32 %v83, %v85
    %v88 = vadd.f32 %v84, %v86
    %89 = vrot.lane.b32.xlu0 %v63, 127
    %v90 = vpop.permute.xlu0 %89
    %91 = vrot.lane.b32.xlu0 %v64, 127
    %v92 = vpop.permute.xlu0 %91
    %v93 = vsel %vm30, %v90, 0.0
    %v94 = vsel %vm30, %v92, 0.0
    %v95 = vadd.f32 %v87, %v93
    %v96 = vadd.f32 %v88, %v94
    %v97 = vand.u32 2147483647, %v77
    %v98 = vand.u32 2147483647, %v78
    %v99 = vand.u32 2147483647, %v95
    %v100 = vand.u32 2147483647, %v96
    %v101 = vadd.f32 %v97, %v99
    %v102 = vadd.f32 %v98, %v100
    %v103 = vadd.f32 %v101, %v102
    %v104 = vrot.slane %v103, 4
    %v105 = vadd.f32 %v103, %v104
    %v106 = vrot.slane %v105, 2
    %v107 = vadd.f32 %v105, %v106
    %v108 = vrot.slane %v107, 1
    %v109 = vadd.f32 %v107, %v108
    %v110 = vadd.f32 %v109, 0.0
    %s111 = scalar_lea.vmem [#allocation3], 64
    %v112 = vld [vmem:[%s111] sm:$0xff]
    %v113 = vld [vmem:[%s111 + $0x8] sm:$0xff]
    %s114 = scalar_lea.vmem [#allocation3], 80
    %v115 = vld [vmem:[%s114] sm:$0xff]
    %v116 = vld [vmem:[%s114 + $0x8] sm:$0xff]
    %v117 = vadd.f32 %v112, %v115
    %v118 = vadd.f32 %v113, %v116
    %s119 = scalar_lea.vmem [#allocation3], 96
    %v120 = vld [vmem:[%s119] sm:$0xff]
    %v121 = vld [vmem:[%s119 + $0x8] sm:$0xff]
    %v122 = vadd.f32 %v117, %v120
    %v123 = vadd.f32 %v118, %v121
    %s124 = scalar_lea.vmem [#allocation3], 112
    %v125 = vld [vmem:[%s124] sm:$0xff]
    %v126 = vld [vmem:[%s124 + $0x8] sm:$0xff]
    %v127 = vadd.f32 %v122, %v125
    %v128 = vadd.f32 %v123, %v126
    %129 = vst.msk [vmem:[#allocation2 + $0x8] sm:$0xff] %vm48, %v127
    %130 = vst.msk [vmem:[#allocation2 + $0x10] sm:$0xff] %vm48, %v128
    %v131 = vld [vmem:[#allocation2 + $0x7] sm:$0xff]
    %v132 = vld [vmem:[#allocation2 + $0xf] sm:$0xff]
    %v133 = vld [vmem:[#allocation2 + $0x8] sm:$0xff]
    %v134 = vld [vmem:[#allocation2 + $0x10] sm:$0xff]
    %v135 = vld [vmem:[#allocation2 + $0x9] sm:$0xff]
    %v136 = vld [vmem:[#allocation2 + $0x11] sm:$0xff]
    %v137 = vmul.f32 %v133, 2.0
    %v138 = vmul.f32 %v134, 2.0
    %v139 = vadd.f32 %v131, %v137
    %v140 = vadd.f32 %v132, %v138
    %v141 = vadd.f32 %v139, %v135
    %v142 = vadd.f32 %v140, %v136
    %v143 = vsub.f32 %v135, %v131
    %v144 = vsub.f32 %v136, %v132
    %145 = vrot.lane.b32.xlu0 %v141, 127
    %v146 = vpop.permute.xlu0 %145
    %147 = vrot.lane.b32.xlu0 %v142, 127
    %v148 = vpop.permute.xlu0 %147
    %v149 = vsel %vm30, %v146, 0.0
    %v150 = vsel %vm30, %v148, 0.0
    %151 = vrot.lane.b32.xlu0 %v141, 1
    %v152 = vpop.permute.xlu0 %151
    %153 = vrot.lane.b32.xlu0 %v142, 1
    %v154 = vpop.permute.xlu0 %153
    %v155 = vsel %vm29, %v152, 0.0
    %v156 = vsel %vm29, %v154, 0.0
    %v157 = vsub.f32 %v149, %v155
    %v158 = vsub.f32 %v150, %v156
    %159 = vrot.lane.b32.xlu0 %v143, 1
    %v160 = vpop.permute.xlu0 %159
    %161 = vrot.lane.b32.xlu0 %v144, 1
    %v162 = vpop.permute.xlu0 %161
    %v163 = vsel %vm29, %v160, 0.0
    %v164 = vsel %vm29, %v162, 0.0
    %v165 = vmul.f32 %v143, 2.0
    %v166 = vmul.f32 %v144, 2.0
    %v167 = vadd.f32 %v163, %v165
    %v168 = vadd.f32 %v164, %v166
    %169 = vrot.lane.b32.xlu0 %v143, 127
    %v170 = vpop.permute.xlu0 %169
    %171 = vrot.lane.b32.xlu0 %v144, 127
    %v172 = vpop.permute.xlu0 %171
    %v173 = vsel %vm30, %v170, 0.0
    %v174 = vsel %vm30, %v172, 0.0
    %v175 = vadd.f32 %v167, %v173
    %v176 = vadd.f32 %v168, %v174
    %v177 = vand.u32 2147483647, %v157
    %v178 = vand.u32 2147483647, %v158
    %v179 = vand.u32 2147483647, %v175
    %v180 = vand.u32 2147483647, %v176
    %v181 = vadd.f32 %v177, %v179
    %v182 = vadd.f32 %v178, %v180
    %v183 = vadd.f32 %v181, %v182
    %v184 = vrot.slane %v183, 4
    %v185 = vadd.f32 %v183, %v184
    %v186 = vrot.slane %v185, 2
    %v187 = vadd.f32 %v185, %v186
    %v188 = vrot.slane %v187, 1
    %v189 = vadd.f32 %v187, %v188
    %v190 = vadd.f32 %v110, %v189
    %191 = vst [vmem:[#allocation6] sm:$0x1] %v190
    // Predicated region
    $region10: #{tpu_custom_call.1} parent=1 // pred_check
      _
    $region11: #{tpu_custom_call.1} parent=1 // pred_check_branch
      %193 = sbr.rel (0) target = $region13
    $region12: #{tpu_custom_call.1} parent=1 // pred_region
      %195 = vsyncadd [#allocation5], 0
      %s197 = sshll.u32 [#allocation6], 4
      %s198 = int_to_ptr.vmem [resolvable:$true] %s197
      %s199 = sshll.u32 %s1, 4
      %s200 = int_to_ptr.hbm [resolvable:$true] %s199
      %202 = dma.vmem_to_hbm [thread:$0]  %s198, 16, %s200, [#allocation5]
    $region13: #{tpu_custom_call.1} parent=1 // pred_fallthru
      _
    // Predicated region
    $region14: #{tpu_custom_call.1} parent=1 // pred_check
      _
    $region15: #{tpu_custom_call.1} parent=1 // pred_check_branch
      %204 = sbr.rel (0) target = $region17
    $region16: #{tpu_custom_call.1} parent=1 // pred_region
      %206 = dma.done [#allocation5], 16
    $region17: #{tpu_custom_call.1} parent=1 // pred_fallthru
      _
    %207 = vsyncpa [#allocation4], 1
    %208 = vsyncpa [#allocation5], 1

</llo_original>
